<compile_context>
chip_gen: v7x
topology: tpu7x:2x2x1
jax: 0.10.0
libtpu: 0.0.40
codegen_flags: <defaults>
</compile_context>

<pallas_src>
import functools

import jax
import jax.numpy as jnp
from jax.experimental import pallas as pl
from jax.experimental.pallas import tpu as pltpu


def _cdiv(a, b):
    return (a + b - 1) // b


def _round_up(x, m):
    return _cdiv(x, m) * m


def _focal_loss_kernel(x_ref, t_ref, a_ref, o_ref, acc_ref, *,
                       gamma, n_valid, tile_s, blocks_per_split):
    p = pl.program_id(0)   # batch split ("parallel": one per TensorCore on v7x)
    j = pl.program_id(1)   # sample-block within the split ("arbitrary")

    @pl.when(j == 0)
    def _init():
        acc_ref[p] = jnp.zeros((1, tile_s), dtype=jnp.float32)

    x = x_ref[...].astype(jnp.float32)   # (C, tile_s): classes on sublanes
    t = t_ref[...]                       # (1, tile_s): int32 targets, lane-dense
    a = a_ref[...].astype(jnp.float32)   # (C, 1): per-class alpha, resident

    # One-hot class mask (the torch scatter_): class id runs along sublanes.
    cls = jax.lax.broadcasted_iota(jnp.int32, x.shape, 0)
    mask = (cls == t).astype(jnp.float32)                    # (C, tile_s)

    # Per-sample log-sum-exp over classes: cheap sublane reductions, results
    # are lane-dense (1, tile_s) vectors.  The full softmax never materializes.
    m = jnp.max(x, axis=0, keepdims=True)                    # (1, tile_s)
    denom = jnp.sum(jnp.exp(x - m), axis=0, keepdims=True)   # (1, tile_s)
    x_t = jnp.sum(x * mask, axis=0, keepdims=True)           # target logit
    a_t = jnp.sum(a * mask, axis=0, keepdims=True)           # alpha[target]
    # NOTE: an out-of-range target id gives an all-zero mask (x_t = a_t = 0)
    # and silently contributes garbage instead of erroring like PyTorch.

    log_p = (x_t - m) - jnp.log(denom)                       # log softmax @ target
    probs = jnp.exp(log_p)
    one_minus = jnp.maximum(1.0 - probs, 0.0)                # clamp (NaN hazard)

    g = float(gamma)
    if g == int(g) and 0 <= int(g) <= 8:
        # Integer gamma (default gamma=2): plain VPU multiplies.
        pw = jnp.ones_like(one_minus)
        for _ in range(int(g)):
            pw = pw * one_minus
    else:
        pw = jnp.power(one_minus, g)

    loss = -a_t * pw * log_p                                 # (1, tile_s)

    # Mask samples past the true batch (final partial block / clamped overhang
    # block of an uneven split).  Keep this a SELECT (jnp.where): the masked
    # lanes were computed from unspecified pad data and may be NaN/Inf --
    # multiplying by 0 instead WOULD propagate them.
    gb = p * blocks_per_split + j                            # logical block id
    lane = jax.lax.broadcasted_iota(jnp.int32, loss.shape, 1)
    valid = (gb * tile_s + lane) < n_valid
    loss = jnp.where(valid, loss, 0.0)

    # Lane-dense vector accumulation; no per-step scalar reduce / SMEM store.
    acc_ref[p] += loss

    @pl.when(j == pl.num_programs(1) - 1)
    def _finalize():
        total = jnp.sum(acc_ref[p])                          # one reduce, once
        o_ref[...] = jnp.full(o_ref.shape, total, dtype=jnp.float32)


def focal_loss(inputs, targets, alpha, *, gamma=2.0, size_average=True,
               tile_bytes=4 << 20, num_splits=2):
    """Pallas TPU implementation of FocalLoss.forward.

    inputs : (N, C) float logits (any float dtype; cast to f32 in-kernel)
    targets: (N,)   integer class ids in [0, C)
    alpha  : (C,) or (C, 1) per-class weights
    returns scalar float32 loss
    """
    N, C = inputs.shape
    item = jnp.dtype(inputs.dtype).itemsize

    # Lane-dense layout: samples -> lanes, classes -> sublanes.  The transpose
    # (and the tiny N<128 pad) is a one-time wrapper-side relayout that fuses
    # into the producer under jit; the kernel then streams a dense (C, N)
    # array instead of a 128-lane-padded (N, C<128) tiled layout.
    x_cn = inputs.T                                            # (C, N)
    t_row = targets.reshape(1, N).astype(jnp.int32)            # (1, N)
    a_col = jnp.asarray(alpha, dtype=jnp.float32).reshape(-1, 1)  # (C, 1)
    if a_col.shape[0] != C:
        raise ValueError("alpha must have one entry per class")

    n_lanes = N
    if N < 128:
        # Only pad when the whole batch is smaller than one lane block; for
        # N >= 128 the final partial block is handled by the in-kernel mask.
        n_lanes = 128
        x_cn = jnp.pad(x_cn, ((0, 0), (0, 128 - N)))
        t_row = jnp.pad(t_row, ((0, 0), (0, 128 - N)))

    # Tile the sample (lane) axis by BYTES of logits (default ~4 MiB), not a
    # fixed row cap: big tiles amortize the ~0.35 us per-grid-step overhead
    # and sit near the HBM roofline.
    col_bytes = max(C * item, 1)
    tile_s = (int(tile_bytes) // col_bytes) // 128 * 128
    tile_s = max(128, min(tile_s, (n_lanes // 128) * 128))

    n_blocks = _cdiv(n_lanes, tile_s)
    num_splits = max(1, min(int(num_splits), n_blocks))
    bps = _cdiv(n_blocks, num_splits)

    def data_map(p, j):
        # Clamp so the overhang step of an uneven split issues an in-bounds
        # (redundant) DMA; its contribution is masked out in-kernel using the
        # *logical* block id p*bps + j.
        return (0, jnp.minimum(p * bps + j, n_blocks - 1))

    kernel = functools.partial(
        _focal_loss_kernel,
        gamma=float(gamma),
        n_valid=int(N),
        tile_s=int(tile_s),
        blocks_per_split=int(bps),
    )

    # Explicit VMEM budget derived from the actual tiles (accounting for the
    # dtype's sublane packing: 8 rows f32 / 16 bf16 / 32 int8), instead of
    # relying on each generation's default scoped limit.
    sub = max(1, 32 // item)
    cp = _round_up(C, sub)
    vmem_need = (2 * cp * tile_s * item            # double-buffered logits
                 + 2 * 8 * tile_s * 4              # double-buffered targets row
                 + num_splits * 8 * tile_s * 4     # accumulator scratch
                 + 2 * _round_up(C, 8) * 128 * 4   # resident alpha
                 + 2 * num_splits * 8 * 128 * 4)   # partial-sum output
    vmem_limit = int(min(max(vmem_need + (4 << 20), 16 << 20), 48 << 20))

    out = pl.pallas_call(
        kernel,
        out_shape=jax.ShapeDtypeStruct((num_splits, 8, 128), jnp.float32),
        grid=(num_splits, bps),
        in_specs=[
            pl.BlockSpec((C, tile_s), data_map),         # logits, native dtype
            pl.BlockSpec((1, tile_s), data_map),         # targets, lane-dense
            pl.BlockSpec((C, 1), lambda p, j: (0, 0)),   # alpha, resident
        ],
        out_specs=pl.BlockSpec((1, 8, 128), lambda p, j: (p, 0, 0)),
        scratch_shapes=[pltpu.VMEM((num_splits, 1, tile_s), jnp.float32)],
        compiler_params=pltpu.CompilerParams(
            # Leading axis "parallel": on v7x the two batch splits run on the
            # two TensorCores, each with its own accumulator slice; on
            # v5e/v6e (1 TC) it simply runs sequentially.
            dimension_semantics=("parallel", "arbitrary"),
            vmem_limit_bytes=vmem_limit,
        ),
    )(x_cn, t_row, a_col)

    total = jnp.sum(out[:, 0, 0])                     # combine split partials
    if size_average:
        return total / jnp.float32(N)
    return total


def _focal_loss_ref(inputs, targets, alpha, *, gamma=2.0, size_average=True):
    """Pure-JAX reference mirroring the PyTorch module."""
    p = jax.nn.softmax(inputs.astype(jnp.float32), axis=1)
    n = inputs.shape[0]
    probs = p[jnp.arange(n), targets]
    a = jnp.reshape(alpha, (-1,))[targets].astype(jnp.float32)
    batch_loss = -a * jnp.power(1.0 - probs, gamma) * jnp.log(probs)
    return jnp.mean(batch_loss) if size_average else jnp.sum(batch_loss)


if __name__ == "__main__":
    key = jax.random.PRNGKey(0)
    k1, k2, k3, k4 = jax.random.split(key, 4)

    # Case 1: module defaults (alpha=None -> ones (C,1), gamma=2, mean);
    # N=72 < 128 exercises the small-batch pad + mean-by-true-N path.
    N, C = 72, 16
    inputs = jax.random.normal(k1, (N, C), dtype=jnp.float32)
    targets = jax.random.randint(k2, (N,), 0, C, dtype=jnp.int32)
    alpha_ones = jnp.ones((C, 1), dtype=jnp.float32)
    loss = jax.block_until_ready(
        focal_loss(inputs, targets, alpha_ones, gamma=2.0, size_average=True))
    ref = _focal_loss_ref(inputs, targets, alpha_ones, gamma=2.0,
                          size_average=True)
    assert jnp.allclose(loss, ref, rtol=1e-5, atol=1e-6), (loss, ref)

    # Case 2: non-uniform alpha, sum reduction (alpha-via-mask + sum branch).
    alpha_var = (jnp.arange(1, C + 1, dtype=jnp.float32) / C).reshape(C, 1)
    loss2 = jax.block_until_ready(
        focal_loss(inputs, targets, alpha_var, gamma=2.0, size_average=False))
    ref2 = _focal_loss_ref(inputs, targets, alpha_var, gamma=2.0,
                           size_average=False)
    assert jnp.allclose(loss2, ref2, rtol=1e-5, atol=1e-5), (loss2, ref2)

    # Case 3: multi-block + 2-way parallel split + uneven overhang block +
    # partial final block + C not a multiple of 8 (tiny tile_bytes forces
    # 3 blocks of 128 samples over a 2-way split).
    N3, C3 = 300, 10
    inputs3 = jax.random.normal(k3, (N3, C3), dtype=jnp.float32)
    targets3 = jax.random.randint(k4, (N3,), 0, C3, dtype=jnp.int32)
    alpha3 = (jnp.arange(1, C3 + 1, dtype=jnp.float32) / C3).reshape(C3, 1)
    loss3 = jax.block_until_ready(
        focal_loss(inputs3, targets3, alpha3, gamma=2.0, size_average=True,
                   tile_bytes=C3 * 4 * 128, num_splits=2))
    ref3 = _focal_loss_ref(inputs3, targets3, alpha3, gamma=2.0,
                           size_average=True)
    assert jnp.allclose(loss3, ref3, rtol=1e-5, atol=1e-6), (loss3, ref3)

    print("KERNEL_OK")
</pallas_src>

<mosaic_0001>
module attributes {stable_mosaic.version = 11 : i64} {
  func.func @_focal_loss_kernel(%arg0: i32, %arg1: i32, %arg2: memref<16x128xf32, #tpu.memory_space<vmem>>, %arg3: memref<1x128xi32, #tpu.memory_space<vmem>>, %arg4: memref<16x1xf32, #tpu.memory_space<vmem>>, %arg5: memref<1x8x128xf32, #tpu.memory_space<vmem>>, %arg6: memref<1x1x128xf32, #tpu.memory_space<vmem>>) attributes {dimension_semantics = [#tpu.dimension_semantics<parallel>, #tpu.dimension_semantics<arbitrary>], iteration_bounds = array<i64: 1, 1>, scalar_prefetch = 0 : i64, scratch_operands = 1 : i64, tpu.core_type = #tpu.core_type<tc>, window_params = [{transform_indices = @transform_0, window_bounds = array<i64: 16, 128>}, {transform_indices = @transform_1, window_bounds = array<i64: 1, 128>}, {pipeline_mode = #tpu.pipeline_mode<synchronous>, transform_indices = @transform_2, window_bounds = array<i64: 16, 1>}, {transform_indices = @transform_3, window_bounds = array<i64: 1, 8, 128>}]} {
    %c0_i32 = arith.constant 0 : i32
    %0 = arith.cmpi eq, %arg1, %c0_i32 : i32
    %1 = arith.extui %0 : i1 to i32
    %c0_i32_0 = arith.constant 0 : i32
    %2 = arith.cmpi ne, %1, %c0_i32_0 : i32
    scf.if %2 {
      %cst_20 = arith.constant 0.000000e+00 : f32
      %61 = vector.broadcast %cst_20 : f32 to vector<1x128xf32>
      %62 = arith.index_cast %arg0 : i32 to index
      %c0_21 = arith.constant 0 : index
      %c0_22 = arith.constant 0 : index
      %63 = vector.load %arg6[%62, %c0_21, %c0_22] : memref<1x1x128xf32, #tpu.memory_space<vmem>>, vector<1x1x128xf32>
      %64 = vector.shape_cast %63 : vector<1x1x128xf32> to vector<1x128xf32>
      %65 = vector.shape_cast %61 : vector<1x128xf32> to vector<1x1x128xf32>
      tpu.vector_store %arg6[%62, %c0_21, %c0_22], %65 {strides = array<i32>} : memref<1x1x128xf32, #tpu.memory_space<vmem>>, vector<1x1x128xf32>,
    } else {
    }
    %c0 = arith.constant 0 : index
    %c0_1 = arith.constant 0 : index
    %3 = vector.load %arg2[%c0, %c0_1] : memref<16x128xf32, #tpu.memory_space<vmem>>, vector<16x128xf32>
    %c0_2 = arith.constant 0 : index
    %c0_3 = arith.constant 0 : index
    %4 = vector.load %arg3[%c0_2, %c0_3] : memref<1x128xi32, #tpu.memory_space<vmem>>, vector<1x128xi32>
    %c0_4 = arith.constant 0 : index
    %c0_5 = arith.constant 0 : index
    %5 = vector.load %arg4[%c0_4, %c0_5] : memref<16x1xf32, #tpu.memory_space<vmem>>, vector<16x1xf32>
    %6 = tpu.iota {dimensions = array<i32: 0>} : vector<16x128xi32>
    %7 = vector.broadcast %4 : vector<1x128xi32> to vector<16x128xi32>
    %8 = arith.cmpi eq, %6, %7 : vector<16x128xi32>
    %9 = arith.extui %8 : vector<16x128xi1> to vector<16x128xi32>
    %10 = arith.sitofp %9 : vector<16x128xi32> to vector<16x128xf32>
    %cst = arith.constant dense<0xFF800000> : vector<128xf32>
    %11 = vector.multi_reduction <maximumf>, %3, %cst [0] : vector<16x128xf32> to vector<128xf32>
    %12 = vector.shape_cast %11 : vector<128xf32> to vector<1x128xf32>
    %13 = vector.broadcast %12 : vector<1x128xf32> to vector<16x128xf32>
    %14 = arith.subf %3, %13 : vector<16x128xf32>
    %15 = math.exp %14 : vector<16x128xf32>
    %cst_6 = arith.constant dense<0.000000e+00> : vector<128xf32>
    %16 = vector.multi_reduction <add>, %15, %cst_6 [0] : vector<16x128xf32> to vector<128xf32>
    %17 = vector.shape_cast %16 : vector<128xf32> to vector<1x128xf32>
    %18 = arith.mulf %3, %10 : vector<16x128xf32>
    %cst_7 = arith.constant dense<0.000000e+00> : vector<128xf32>
    %19 = vector.multi_reduction <add>, %18, %cst_7 [0] : vector<16x128xf32> to vector<128xf32>
    %20 = vector.shape_cast %19 : vector<128xf32> to vector<1x128xf32>
    %21 = vector.broadcast %5 : vector<16x1xf32> to vector<16x128xf32>
    %22 = arith.mulf %21, %10 : vector<16x128xf32>
    %cst_8 = arith.constant dense<0.000000e+00> : vector<128xf32>
    %23 = vector.multi_reduction <add>, %22, %cst_8 [0] : vector<16x128xf32> to vector<128xf32>
    %24 = vector.shape_cast %23 : vector<128xf32> to vector<1x128xf32>
    %25 = arith.subf %20, %12 : vector<1x128xf32>
    %26 = math.log %17 : vector<1x128xf32>
    %27 = arith.subf %25, %26 : vector<1x128xf32>
    %28 = math.exp %27 : vector<1x128xf32>
    %cst_9 = arith.constant 1.000000e+00 : f32
    %29 = vector.broadcast %cst_9 : f32 to vector<1x128xf32>
    %30 = arith.subf %29, %28 : vector<1x128xf32>
    %cst_10 = arith.constant 0.000000e+00 : f32
    %31 = vector.broadcast %cst_10 : f32 to vector<1x128xf32>
    %32 = arith.maximumf %30, %31 : vector<1x128xf32>
    %cst_11 = arith.constant 1.000000e+00 : f32
    %33 = vector.broadcast %cst_11 : f32 to vector<1x128xf32>
    %34 = arith.mulf %33, %32 : vector<1x128xf32>
    %35 = arith.mulf %34, %32 : vector<1x128xf32>
    %cst_12 = arith.constant 0.000000e+00 : f32
    %36 = vector.broadcast %cst_12 : f32 to vector<1x128xf32>
    %37 = arith.subf %36, %24 : vector<1x128xf32>
    %38 = arith.mulf %37, %35 : vector<1x128xf32>
    %39 = arith.mulf %38, %27 : vector<1x128xf32>
    %c1_i32 = arith.constant 1 : i32
    %40 = arith.muli %arg0, %c1_i32 : i32
    %41 = arith.addi %40, %arg1 : i32
    %42 = tpu.iota {dimensions = array<i32: 1>} : vector<1x128xi32>
    %c128_i32 = arith.constant 128 : i32
    %43 = arith.muli %41, %c128_i32 : i32
    %44 = vector.broadcast %43 : i32 to vector<1x128xi32>
    %45 = arith.addi %44, %42 : vector<1x128xi32>
    %c72_i32 = arith.constant 72 : i32
    %46 = vector.broadcast %c72_i32 : i32 to vector<1x128xi32>
    %47 = arith.cmpi slt, %45, %46 : vector<1x128xi32>
    %cst_13 = arith.constant 0.000000e+00 : f32
    %48 = vector.broadcast %cst_13 : f32 to vector<1x128xf32>
    %49 = arith.select %47, %39, %48 : vector<1x128xi1>, vector<1x128xf32>
    %50 = arith.index_cast %arg0 : i32 to index
    %c0_14 = arith.constant 0 : index
    %c0_15 = arith.constant 0 : index
    %51 = vector.load %arg6[%50, %c0_14, %c0_15] : memref<1x1x128xf32, #tpu.memory_space<vmem>>, vector<1x1x128xf32>
    %52 = vector.shape_cast %51 : vector<1x1x128xf32> to vector<1x128xf32>
    %53 = arith.addf %52, %49 : vector<1x128xf32>
    %54 = arith.index_cast %arg0 : i32 to index
    %c0_16 = arith.constant 0 : index
    %c0_17 = arith.constant 0 : index
    %55 = vector.load %arg6[%54, %c0_16, %c0_17] : memref<1x1x128xf32, #tpu.memory_space<vmem>>, vector<1x1x128xf32>
    %56 = vector.shape_cast %55 : vector<1x1x128xf32> to vector<1x128xf32>
    %57 = vector.shape_cast %53 : vector<1x128xf32> to vector<1x1x128xf32>
    tpu.vector_store %arg6[%54, %c0_16, %c0_17], %57 {strides = array<i32>} : memref<1x1x128xf32, #tpu.memory_space<vmem>>, vector<1x1x128xf32>,
    %c0_i32_18 = arith.constant 0 : i32
    %58 = arith.cmpi eq, %arg1, %c0_i32_18 : i32
    %59 = arith.extui %58 : i1 to i32
    %c0_i32_19 = arith.constant 0 : i32
    %60 = arith.cmpi ne, %59, %c0_i32_19 : i32
    scf.if %60 {
      %61 = arith.index_cast %arg0 : i32 to index
      %c0_20 = arith.constant 0 : index
      %c0_21 = arith.constant 0 : index
      %62 = vector.load %arg6[%61, %c0_20, %c0_21] : memref<1x1x128xf32, #tpu.memory_space<vmem>>, vector<1x1x128xf32>
      %63 = vector.shape_cast %62 : vector<1x1x128xf32> to vector<1x128xf32>
      %64 = vector.shape_cast %63 : vector<1x128xf32> to vector<1x1x128xf32>
      %cst_22 = arith.constant dense<0.000000e+00> : vector<1xf32>
      %65 = vector.multi_reduction <add>, %64, %cst_22 [1, 2] : vector<1x1x128xf32> to vector<1xf32>
      %66 = vector.shape_cast %65 : vector<1xf32> to vector<1x1x1xf32>
      %67 = vector.extract %66[0, 0, 0] : f32 from vector<1x1x1xf32>
      %68 = vector.broadcast %67 : f32 to vector<1x8x128xf32>
      %c0_23 = arith.constant 0 : index
      %c0_24 = arith.constant 0 : index
      %c0_25 = arith.constant 0 : index
      %69 = vector.load %arg5[%c0_23, %c0_24, %c0_25] : memref<1x8x128xf32, #tpu.memory_space<vmem>>, vector<1x8x128xf32>
      tpu.vector_store %arg5[%c0_23, %c0_24, %c0_25], %68 {strides = array<i32>} : memref<1x8x128xf32, #tpu.memory_space<vmem>>, vector<1x8x128xf32>,
    } else {
    }
    return
  }
  func.func @transform_0(%arg0: i32, %arg1: i32) -> (i32, i32) {
    %c1_i32 = arith.constant 1 : i32
    %0 = arith.muli %arg0, %c1_i32 : i32
    %1 = arith.addi %0, %arg1 : i32
    %c0_i32 = arith.constant 0 : i32
    %2 = arith.minsi %1, %c0_i32 : i32
    %c0_i32_0 = arith.constant 0 : i32
    %c0_i32_1 = arith.constant 0 : i32
    return %c0_i32_0, %2 : i32, i32
  }
  func.func @transform_1(%arg0: i32, %arg1: i32) -> (i32, i32) {
    %c1_i32 = arith.constant 1 : i32
    %0 = arith.muli %arg0, %c1_i32 : i32
    %1 = arith.addi %0, %arg1 : i32
    %c0_i32 = arith.constant 0 : i32
    %2 = arith.minsi %1, %c0_i32 : i32
    %c0_i32_0 = arith.constant 0 : i32
    %c0_i32_1 = arith.constant 0 : i32
    return %c0_i32_0, %2 : i32, i32
  }
  func.func @transform_2(%arg0: i32, %arg1: i32) -> (i32, i32) {
    %c0_i32 = arith.constant 0 : i32
    %c0_i32_0 = arith.constant 0 : i32
    %c0_i32_1 = arith.constant 0 : i32
    return %c0_i32, %c0_i32_0 : i32, i32
  }
  func.func @transform_3(%arg0: i32, %arg1: i32) -> (i32, i32, i32) {
    %c0_i32 = arith.constant 0 : i32
    %c0_i32_0 = arith.constant 0 : i32
    %c0_i32_1 = arith.constant 0 : i32
    return %arg0, %c0_i32, %c0_i32_0 : i32, i32, i32
  }
}

</mosaic_0001>

<llo_original>
// kernel: tpu_custom_call.1
$region0: #{tpu_custom_call.1}
  #allocation0 [shape = 'u32[]', space=smem, size = 0x4, offset = 0x4, fixed_abs, tag = 'smem constant byte address 0x4 - core index']
  #allocation1 [shape = 'u32[144,128]{1,0:T(1,128)}', space=vmem, size = 0x12000, scoped, tag = 'internal scratch']
  #allocation2 [shape = 'f32[1,1,128]{2,1,0:T(1,128)}', space=vmem, size = 0x200, scoped, tag = 'scratch operand']
  %s0 = inlined_call_operand.vmem [shape: f32[16,128], index: 0, kind: input, shape index: {}]
  %s1 = inlined_call_operand.vmem [shape: s32[1,128], index: 1, kind: input, shape index: {}]
  %s2 = inlined_call_operand.vmem [shape: f32[16,1], index: 2, kind: input, shape index: {}]
  %s3 = inlined_call_operand.hbm [shape: f32[1,8,128], index: 3, kind: output, shape index: {}]
  %s4 = sld [smem:[#allocation0]]
  $region30: #{tpu_custom_call.1} parent=0
    _
  %s6 = ssub.s32 1, %s4
  %s7 = scalar_select 0, %s6, %s4
  $region1: #{tpu_custom_call.1} parent=0
    #allocation3 [shape = 'u8[4096]{0}', space=vmem, size = 0x1000, scoped, tag = 'output window, operand 0, single buffered']
    #allocation4 [shape = 's32[1]{0}', space=sflag, size = 0x4, scoped, tag = 'scoped memory for tpu_custom_call.1']
    %8 = vsyncpa [#allocation4], 0
    // Predicated region
    $region2: #{tpu_custom_call.1} parent=1 // pred_check
      _
    $region3: #{tpu_custom_call.1} parent=1 // pred_check_branch
      %10 = sbr.rel (0) target = $region5
    $region4: #{tpu_custom_call.1} parent=1 // pred_region
      %s11 = sadd.s32 0, 0
      %p12 = scmp.lt.s32.totalorder %s11, 0
      %s13 = scalar_select %p12, %s11, 0
      %p14 = scmp.lt.s32.totalorder %s13, 0
      %s15 = scalar_select %p14, %s13, 0
      %s16 = smul.addr %s15, 8
      %s17 = scalar_lea.vmem %s0, %s16
      %s18 = sadd.s32 0, 0
      %p19 = scmp.lt.s32.totalorder %s18, 0
      %s20 = scalar_select %p19, %s18, 0
    $region5: #{tpu_custom_call.1} parent=1 // pred_fallthru
      _
    // Predicated region
    $region6: #{tpu_custom_call.1} parent=1 // pred_check
      _
    $region7: #{tpu_custom_call.1} parent=1 // pred_check_branch
      %22 = sbr.rel (0) target = $region9
    $region8: #{tpu_custom_call.1} parent=1 // pred_region
      %s23 = sadd.s32 0, 0
      %p24 = scmp.lt.s32.totalorder %s23, 0
      %s25 = scalar_select %p24, %s23, 0
      %p26 = scmp.lt.s32.totalorder %s25, 0
      %s27 = scalar_select %p26, %s25, 0
      %s28 = scalar_lea.vmem %s1, %s27
      %s29 = sadd.s32 0, 0
      %p30 = scmp.lt.s32.totalorder %s29, 0
      %s31 = scalar_select %p30, %s29, 0
    $region9: #{tpu_custom_call.1} parent=1 // pred_fallthru
      _
    // Predicated region
    $region10: #{tpu_custom_call.1} parent=1 // pred_check
      _
    $region11: #{tpu_custom_call.1} parent=1 // pred_check_branch
      %33 = sbr.rel (0) target = $region13
    $region12: #{tpu_custom_call.1} parent=1 // pred_region
      _
    $region13: #{tpu_custom_call.1} parent=1 // pred_fallthru
      _
    %s34 = sadd.s32 0, 0
    %p35 = scmp.lt.s32.totalorder %s34, 0
    %s36 = scalar_select %p35, %s34, 0
    %p37 = scmp.lt.s32.totalorder %s36, 0
    %s38 = scalar_select %p37, %s36, 0
    %s39 = smul.addr %s38, 8
    %s40 = scalar_lea.vmem %s0, %s39
    %s41 = sadd.s32 0, 0
    %p42 = scmp.lt.s32.totalorder %s41, 0
    %s43 = scalar_select %p42, %s41, 0
    %p44 = scmp.lt.s32.totalorder %s43, 0
    %s45 = scalar_select %p44, %s43, 0
    %s46 = scalar_lea.vmem %s1, %s45
    %s47 = sadd.s32 0, 0
    %p48 = scmp.lt.s32.totalorder %s47, 0
    %s49 = scalar_select %p48, %s47, 0
    %p50 = scmp.lt.s32.totalorder %s49, 0
    %s51 = scalar_select %p50, %s49, 0
    %s52 = smul.addr %s51, 8
    %s53 = scalar_lea.vmem %s0, %s52
    %s54 = sadd.s32 0, 0
    %p55 = scmp.lt.s32.totalorder %s54, 0
    %s56 = scalar_select %p55, %s54, 0
    %s57 = sadd.s32 0, 0
    %p58 = scmp.lt.s32.totalorder %s57, 0
    %s59 = scalar_select %p58, %s57, 0
    %p60 = scmp.lt.s32.totalorder %s59, 0
    %s61 = scalar_select %p60, %s59, 0
    %s62 = scalar_lea.vmem %s1, %s61
    %s63 = sadd.s32 0, 0
    %p64 = scmp.lt.s32.totalorder %s63, 0
    %s65 = scalar_select %p64, %s63, 0
    %p66 = scmp.eq.s32.totalorder 0, 0
    // Predicated region
    $region14: #{tpu_custom_call.1} parent=1 // pred_check
      %p67 = pneg %p66
    $region15: #{tpu_custom_call.1} parent=1 // pred_check_branch
      %69 = sbr.rel (%p67) target = $region17
    $region16: #{tpu_custom_call.1} parent=1 // pred_region
      %70 = vst [vmem:[#allocation2] sm:$0x1] 0.0
    $region17: #{tpu_custom_call.1} parent=1 // pred_fallthru
      _
    %v71 = vld [vmem:[%s53] sm:$0xff]
    %v72 = vld [vmem:[%s53 + $0x8] sm:$0xff]
    %v73 = vld [vmem:[%s62] sm:$0x1]
    %v74 = vld [vmem:[%s2] sm:$0xff]
    %v75 = vld [vmem:[%s2 + $0x8] sm:$0xff]
    %v76 = vlaneseq
    %v77 = vshrl.u32 %v76, 7
    %v78 = vadd.s32 %v77, 8
    %v79 = vlaneseq
    %v80 = vshrl.u32 %v79, 7
    %v81 = vsub.s32 0, %v80
    %v82 = vrot.slane %v73, %v81
    %vm83 = vcmp.eq.s32.totalorder %v77, %v82
    %vm84 = vcmp.eq.s32.totalorder %v78, %v82
    %v85 = vsel %vm83, 1, 0
    %v86 = vsel %vm84, 1, 0
    %v87 = vcvt.s32.f32 %v85
    %v88 = vcvt.s32.f32 %v86
    %v89 = vmax.f32 %v71, %v72
    %v90 = vrot.slane %v89, 4
    %v91 = vmax.f32 %v89, %v90
    %v92 = vrot.slane %v91, 2
    %v93 = vmax.f32 %v91, %v92
    %v94 = vrot.slane %v93, 1
    %v95 = vmax.f32 %v93, %v94
    %v96 = vsub.f32 %v71, %v95
    %v97 = vsub.f32 %v72, %v95
    %v98 = vmul.f32 %v96, 1.442695
    %v99 = vpow.pop %v98
    %v100 = vmul.f32 %v97, 1.442695
    %v101 = vpow.pop %v100
    %v102 = vadd.f32 %v99, %v101
    %v103 = vrot.slane %v102, 4
    %v104 = vadd.f32 %v102, %v103
    %v105 = vrot.slane %v104, 2
    %v106 = vadd.f32 %v104, %v105
    %v107 = vrot.slane %v106, 1
    %v108 = vadd.f32 %v106, %v107
    %v109 = vmul.f32 %v71, %v87
    %v110 = vmul.f32 %v72, %v88
    %v111 = vadd.f32 %v109, %v110
    %v112 = vrot.slane %v111, 4
    %v113 = vadd.f32 %v111, %v112
    %v114 = vrot.slane %v113, 2
    %v115 = vadd.f32 %v113, %v114
    %v116 = vrot.slane %v115, 1
    %v117 = vadd.f32 %v115, %v116
    %119 = vset.pattern.permute.xlu0 0
    %120 = vperm.xlu0 %119, %v74
    %v121 = vpop.permute.xlu0 %120
    %124 = vset.pattern.permute.xlu0 0
    %125 = vperm.xlu0 %124, %v75
    %v126 = vpop.permute.xlu0 %125
    %v128 = vmul.f32 %v121, %v87
    %v129 = vmul.f32 %v126, %v88
    %v130 = vadd.f32 %v128, %v129
    %v131 = vrot.slane %v130, 4
    %v132 = vadd.f32 %v130, %v131
    %v133 = vrot.slane %v132, 2
    %v134 = vadd.f32 %v132, %v133
    %v135 = vrot.slane %v134, 1
    %v136 = vadd.f32 %v134, %v135
    %v137 = vsub.f32 %v117, %v95
    %v138 = vlog2.pop %v108
    %v139 = vmul.f32 %v138, 0.6931472
    %v140 = vsub.f32 %v137, %v139
    %v141 = vmul.f32 %v140, 1.442695
    %v142 = vpow.pop %v141
    %v143 = vsub.f32 1.0, %v142
    %v144 = vmax.f32 %v143, 0.0
    %v145 = vmul.f32 %v144, %v144
    %v146 = vsub.f32 0.0, %v136
    %v147 = vmul.f32 %v146, %v145
    %v148 = vmul.f32 %v147, %v140
    %s149 = sadd.s32 0, 0
    %v150 = vlaneseq
    %v151 = vand.u32 %v150, 127
    %s152 = smul.u32 %s149, 128
    %v153 = vstv %s152
    %v154 = vadd.s32 %v153, %v151
    %vm155 = vcmp.lt.s32.totalorder %v154, 72
    %v156 = vsel %vm155, %v148, 0.0
    %v157 = vld [vmem:[#allocation2] sm:$0x1]
    %v158 = vadd.f32 %v157, %v156
    %159 = vst [vmem:[#allocation2] sm:$0x1] %v158
    // Predicated region
    $region18: #{tpu_custom_call.1} parent=1 // pred_check
      %p160 = pneg %p66
    $region19: #{tpu_custom_call.1} parent=1 // pred_check_branch
      %162 = sbr.rel (%p160) target = $region21
    $region20: #{tpu_custom_call.1} parent=1 // pred_region
      %v163 = vld [vmem:[#allocation2] sm:$0x1]
      %vm164 = vcmask 1040384
      %v165 = vsel %vm164, %v163, 0.0
      %166 = vadd.xlane.f32.xlu0 %v165
      %v167 = vpop.xlane.xlu0 %166
      %v168 = vrot.slane %v167, 4
      %v169 = vadd.f32 %v167, %v168
      %v170 = vrot.slane %v169, 2
      %v171 = vadd.f32 %v169, %v170
      %v172 = vrot.slane %v171, 1
      %v173 = vadd.f32 %v171, %v172
      %s174 = vtos %v173
      %v175 = vstv %s174
      %176 = vst [vmem:[#allocation3] sm:$0xff] %v175
    $region21: #{tpu_custom_call.1} parent=1 // pred_fallthru
      _
    // Predicated region
    $region22: #{tpu_custom_call.1} parent=1 // pred_check
      _
    $region23: #{tpu_custom_call.1} parent=1 // pred_check_branch
      %178 = sbr.rel (0) target = $region25
    $region24: #{tpu_custom_call.1} parent=1 // pred_region
      %s180 = ssub.s32 128, 128
      %181 = vsyncadd [#allocation4], %s180
      %s183 = sshll.u32 [#allocation3], 4
      %s184 = int_to_ptr.vmem [resolvable:$true] %s183
      %186 = dma.vmem_to_hbm [thread:$0]  %s184, 128, %s3, [#allocation4]
    $region25: #{tpu_custom_call.1} parent=1 // pred_fallthru
      _
    // Predicated region
    $region26: #{tpu_custom_call.1} parent=1 // pred_check
      _
    $region27: #{tpu_custom_call.1} parent=1 // pred_check_branch
      %188 = sbr.rel (0) target = $region29
    $region28: #{tpu_custom_call.1} parent=1 // pred_region
      %189 = dma.done [#allocation4], 128
    $region29: #{tpu_custom_call.1} parent=1 // pred_fallthru
      _
    %190 = vsyncpa [#allocation4], 1

</llo_original>
